<compile_context>
chip_gen: v6e
topology: v6e:2x2x1
jax: 0.10.0
libtpu: 0.0.40
codegen_flags: <defaults>
</compile_context>

<pallas_src>
from types import SimpleNamespace

import numpy as np
import jax
import jax.numpy as jnp
from jax.experimental import pallas as pl
from jax.experimental.pallas import tpu as pltpu


def _reward_criterion_kernel(gamma_ref, seq_ref, logp_ref, reward_ref,
                             loss_ref, rmean_ref):
    seq = seq_ref[...]                                   # (B, T) int32
    B, T = seq.shape

    # Position of the first zero token in each row (T if there is none).
    lane = jax.lax.broadcasted_iota(jnp.int32, (B, T), 1)            # (B, T)
    first_zero = jnp.min(jnp.where(seq == 0, lane, jnp.int32(T)),
                         axis=1, keepdims=True)                      # (B, 1) i32

    # mask = cat([1, (trunc_seq > 0)[:, :-1]], 1)  ==  (j <= first_zero)
    mask = (lane <= first_zero).astype(jnp.float32)                  # (B, T)

    # sum_t(logp * mask) per row, then one (B,1) multiply by reward_diff.
    row_sum = jnp.sum(logp_ref[...] * mask, axis=1, keepdims=True)   # (B, 1)
    reward = reward_ref[...]                                         # (B, 1)
    out_sum = jnp.sum(row_sum * reward)                              # scalar

    # sum(mask) analytically: per row, number of j with j <= first_zero and
    # j < T is min(first_zero + 1, T); always >= 1 so no divide-by-zero.
    mask_sum = jnp.sum(
        jnp.minimum(first_zero + 1, jnp.int32(T)).astype(jnp.float32))

    gamma = gamma_ref[0, 0]
    loss_ref[0, 0] = -gamma * out_sum / mask_sum
    rmean_ref[0, 0] = jnp.mean(reward)    # == mean of the (B,T) broadcast


@jax.jit
def reward_criterion_aic_kernel(sample_seq, sample_logprobs, reward_diff,
                                temp_gamma):
    """sample_seq (B,T) i32, sample_logprobs (B,T) f32, reward_diff (B,) f32,
    temp_gamma scalar f32.  Returns (loss, reward_diff.mean()) as 0-d arrays."""
    B, T = sample_seq.shape
    gamma_arr = jnp.asarray(temp_gamma, jnp.float32).reshape(1, 1)
    reward_col = jnp.asarray(reward_diff, jnp.float32).reshape(B, 1)
    out_shapes = (
        jax.ShapeDtypeStruct((1, 1), jnp.float32),   # loss
        jax.ShapeDtypeStruct((1, 1), jnp.float32),   # reward_diff.mean()
    )
    loss, rmean = pl.pallas_call(
        _reward_criterion_kernel,
        out_shape=out_shapes,
        in_specs=[
            pl.BlockSpec(memory_space=pltpu.MemorySpace.SMEM),   # temp_gamma
            pl.BlockSpec(memory_space=pltpu.MemorySpace.VMEM),   # sample_seq
            pl.BlockSpec(memory_space=pltpu.MemorySpace.VMEM),   # logprobs
            pl.BlockSpec(memory_space=pltpu.MemorySpace.VMEM),   # reward_diff (B,1)
        ],
        out_specs=(
            pl.BlockSpec(memory_space=pltpu.MemorySpace.SMEM),
            pl.BlockSpec(memory_space=pltpu.MemorySpace.SMEM),
        ),
    )(gamma_arr, jnp.asarray(sample_seq, jnp.int32),
      jnp.asarray(sample_logprobs, jnp.float32), reward_col)
    return loss[0, 0], rmean[0, 0]


class RewardCriterionAIC:
    """Host wrapper mirroring the PyTorch module's scalar bookkeeping."""

    def __init__(self, opt, vocab):
        self.opt = opt
        self.reward_sample_total = 0.0
        self.reward_greedy_total = 0.0
        self.reward_num = 0
        self.alpha_type = opt.rl_alpha_type
        self.alpha = opt.rl_alpha_start
        self.recent_alpha = opt.rl_alpha_recent_start
        self.recent_num = opt.rl_alpha_recent_num
        self.recent_alpha_list = np.linspace(0, 0, self.recent_num)
        self.recent_gamma_list = np.linspace(0, 0, self.recent_num)
        self.recent_index = 0
        self.recent_gamma = 1.0
        self.gamma = opt.rl_gamma
        self.use_gamma = opt.rl_use_gamma
        self.vocab = vocab
        self.beta_incre_start = opt.rl_beta_incre_start
        self.beta_incre_iters_every = opt.rl_beta_incre_iters_every
        self.beta_incre_every_add = opt.rl_beta_incre_every_add
        self.beta_incre_max = opt.rl_beta_incre_max
        self.beta = opt.rl_beta
        self.beta_ini = opt.rl_beta
        self.use_beta_incre = opt.rl_beta_incre_start >= 0
        self.is_beta_incre_linear = opt.is_beta_incre_linear
        self.done_iters = 0
        self.hard_type = opt.rl_hard_type
        self.hard_alpha = opt.rl_hard_alpha
        self.hard_reward = opt.rl_hard_reward
        self.mask_type = opt.rl_mask_type

    def _synthetic_reward(self, greedy_seq, sample_seq, temp_alpha):
        # TODO(synk): utils.get_self_critical_reward_aic is a CIDEr-style text
        # metric over decoded captions and gts; no Pallas equivalent.  A
        # deterministic numeric stand-in with the same shapes/semantics is
        # used: a per-sample scalar reward (the broadcast over T happens
        # algebraically inside the kernel).
        s = np.asarray(sample_seq)
        T = s.shape[1]
        # zero-propagation truncation (matches the in-place loop in the PyTorch forward)
        has_zero = (s == 0).any(axis=1)
        first_zero = np.where(has_zero, (s == 0).argmax(axis=1), T)
        col = np.arange(T)[None, :]
        s = np.where(col < first_zero[:, None], s, 0)
        g = np.asarray(greedy_seq, dtype=np.float32)
        sample_r = (s > 0).mean(axis=1).astype(np.float32)   # (B,)
        greedy_r = (g > 0).mean(axis=1).astype(np.float32)   # (B,)
        diff = (sample_r - temp_alpha * greedy_r).astype(np.float32)   # (B,)
        return diff, float(sample_r.mean()), float(greedy_r.mean())

    def forward(self, sample_seq, sample_seqLogprobs, greedy_seq, gts, mask):
        self.done_iters += 1
        if (self.use_beta_incre and self.done_iters > self.beta_incre_start
                and self.beta < self.beta_incre_max):
            if self.is_beta_incre_linear or \
                    (self.done_iters - self.beta_incre_start) % self.beta_incre_iters_every == 0:
                self.beta = min(
                    self.beta_ini + self.beta_incre_every_add *
                    (self.done_iters - self.beta_incre_start) / self.beta_incre_iters_every,
                    self.beta_incre_max)

        if self.alpha_type == 0:
            temp_alpha = 1.0
        elif self.alpha_type == 1:
            temp_alpha = self.recent_alpha * self.beta
        else:
            temp_alpha = self.alpha * self.beta

        reward_diff, sample_mean, greedy_mean = self._synthetic_reward(
            greedy_seq, sample_seq, temp_alpha)

        self.reward_sample_total += sample_mean
        self.reward_greedy_total += greedy_mean
        self.reward_num += 1
        self.alpha = self.reward_sample_total / self.reward_greedy_total
        current_alpha = sample_mean / greedy_mean
        self.recent_alpha_list[self.recent_index % self.recent_num] = current_alpha
        if sample_mean - greedy_mean * temp_alpha == 0:
            temp_gamma = 1.0
        else:
            temp_gamma = 1.0 / np.abs(sample_mean - temp_alpha * greedy_mean)
        self.recent_gamma_list[self.recent_index % self.recent_num] = temp_gamma
        self.recent_index += 1
        if self.recent_index <= self.recent_num:
            self.recent_alpha = np.mean(self.recent_alpha_list[:self.recent_index])
            self.recent_gamma = np.mean(self.recent_gamma_list[:self.recent_index])
        else:
            self.recent_alpha = np.mean(self.recent_alpha_list)
            self.recent_gamma = np.mean(self.recent_gamma_list)

        if self.use_gamma:
            temp_gamma = self.recent_gamma * self.gamma
        else:
            temp_gamma = 1.0

        # mask_type == 0: mask is rebuilt from sample_seq inside the kernel.
        # TODO(synk): mask_type == 1 (greedy-seq mask) would pass greedy_seq instead.
        # TODO(synk): hard_type == 3 (elementwise reward threshold) is not handled,
        # matching the ambiguous array-vs-scalar comparison in the original.
        loss, rmean = reward_criterion_aic_kernel(
            jnp.asarray(sample_seq, jnp.int32),
            jnp.asarray(sample_seqLogprobs, jnp.float32),
            jnp.asarray(reward_diff, jnp.float32),
            float(temp_gamma),
        )

        if self.hard_type == 1:
            if current_alpha >= self.recent_alpha * self.hard_alpha and self.reward_num > 10:
                loss = loss * 0
        elif self.hard_type == 2:
            if sample_mean >= greedy_mean * self.hard_alpha:
                loss = loss * 0

        return loss, rmean, sample_mean, greedy_mean


if __name__ == "__main__":
    B, T, V = 2, 8, 20

    opt = SimpleNamespace(
        rl_alpha_type=0, rl_alpha_start=1.0, rl_alpha_recent_start=1.0,
        rl_alpha_recent_num=50, rl_gamma=1.0, rl_use_gamma=0,
        rl_beta_incre_start=-1, rl_beta_incre_iters_every=100,
        rl_beta_incre_every_add=0.0, rl_beta_incre_max=1.0, rl_beta=1.0,
        is_beta_incre_linear=0, rl_hard_type=0, rl_hard_alpha=1.0,
        rl_hard_reward=0.0, rl_mask_type=0,
    )
    crit = RewardCriterionAIC(opt, vocab={i: str(i) for i in range(V)})

    key = jax.random.PRNGKey(0)
    k1, k2, k3 = jax.random.split(key, 3)
    sample_seq = jax.random.randint(k1, (B, T), 1, V, dtype=jnp.int32)
    sample_seq = sample_seq.at[0, 5].set(0)          # exercise zero-truncation
    greedy_seq = jax.random.randint(k2, (B, T), 0, V, dtype=jnp.int32)
    sample_logprobs = -jax.random.uniform(k3, (B, T), jnp.float32, 0.1, 3.0)
    gts = jax.random.randint(key, (B, T), 0, V, dtype=jnp.int32)
    mask_in = jnp.ones((B, T), jnp.float32)

    loss, rmean, sample_mean, greedy_mean = crit.forward(
        sample_seq, sample_logprobs, greedy_seq, gts, mask_in)
    jax.block_until_ready(loss)
    jax.block_until_ready(rmean)

    # Host-side reference check of the kernel math (zero-truncated mask + loss).
    s = np.asarray(sample_seq)
    first0 = np.where((s == 0).any(1), (s == 0).argmax(1), T)
    ref_mask = (np.arange(T)[None, :] <= first0[:, None]).astype(np.float32)
    rd = np.asarray(sample_logprobs, np.float32)
    reward_np, _, _ = crit._synthetic_reward(greedy_seq, sample_seq, 1.0)
    ref_loss = -(rd * reward_np[:, None] * ref_mask).sum() / ref_mask.sum()
    assert np.allclose(float(loss), ref_loss, rtol=1e-5, atol=1e-6)
    assert np.allclose(float(rmean), reward_np.mean(), rtol=1e-5, atol=1e-6)

    print("KERNEL_OK")
</pallas_src>

<mosaic_0001>
module attributes {stable_mosaic.version = 11 : i64} {
  func.func @_reward_criterion_kernel(%arg0: memref<1x1xf32, #tpu.memory_space<smem>>, %arg1: memref<2x8xi32, #tpu.memory_space<vmem>>, %arg2: memref<2x8xf32, #tpu.memory_space<vmem>>, %arg3: memref<2x1xf32, #tpu.memory_space<vmem>>, %arg4: memref<1x1xf32, #tpu.memory_space<smem>>, %arg5: memref<1x1xf32, #tpu.memory_space<smem>>) attributes {dimension_semantics = [], scalar_prefetch = 0 : i64, scratch_operands = 0 : i64, tpu.core_type = #tpu.core_type<tc>} {
    %c0 = arith.constant 0 : index
    %c0_0 = arith.constant 0 : index
    %0 = vector.load %arg1[%c0, %c0_0] : memref<2x8xi32, #tpu.memory_space<vmem>>, vector<2x8xi32>
    %1 = tpu.iota {dimensions = array<i32: 1>} : vector<2x8xi32>
    %c0_i32 = arith.constant 0 : i32
    %2 = vector.broadcast %c0_i32 : i32 to vector<2x8xi32>
    %3 = arith.cmpi eq, %0, %2 : vector<2x8xi32>
    %c8_i32 = arith.constant 8 : i32
    %4 = vector.broadcast %c8_i32 : i32 to vector<2x8xi32>
    %5 = arith.select %3, %1, %4 : vector<2x8xi1>, vector<2x8xi32>
    %cst = arith.constant dense<2147483647> : vector<2xi32>
    %6 = vector.multi_reduction <minsi>, %5, %cst [1] : vector<2x8xi32> to vector<2xi32>
    %7 = vector.shape_cast %6 : vector<2xi32> to vector<2x1xi32>
    %8 = vector.broadcast %7 : vector<2x1xi32> to vector<2x8xi32>
    %9 = arith.cmpi sle, %1, %8 : vector<2x8xi32>
    %10 = arith.extui %9 : vector<2x8xi1> to vector<2x8xi32>
    %11 = arith.sitofp %10 : vector<2x8xi32> to vector<2x8xf32>
    %c0_1 = arith.constant 0 : index
    %c0_2 = arith.constant 0 : index
    %12 = vector.load %arg2[%c0_1, %c0_2] : memref<2x8xf32, #tpu.memory_space<vmem>>, vector<2x8xf32>
    %13 = arith.mulf %12, %11 : vector<2x8xf32>
    %cst_3 = arith.constant dense<0.000000e+00> : vector<2xf32>
    %14 = vector.multi_reduction <add>, %13, %cst_3 [1] : vector<2x8xf32> to vector<2xf32>
    %15 = vector.shape_cast %14 : vector<2xf32> to vector<2x1xf32>
    %c0_4 = arith.constant 0 : index
    %c0_5 = arith.constant 0 : index
    %16 = vector.load %arg3[%c0_4, %c0_5] : memref<2x1xf32, #tpu.memory_space<vmem>>, vector<2x1xf32>
    %17 = arith.mulf %15, %16 : vector<2x1xf32>
    %18 = vector.shape_cast %17 : vector<2x1xf32> to vector<1x2x1xf32>
    %cst_6 = arith.constant dense<0.000000e+00> : vector<1xf32>
    %19 = vector.multi_reduction <add>, %18, %cst_6 [1, 2] : vector<1x2x1xf32> to vector<1xf32>
    %20 = vector.shape_cast %19 : vector<1xf32> to vector<1x1x1xf32>
    %21 = vector.extract %20[0, 0, 0] : f32 from vector<1x1x1xf32>
    %c1_i32 = arith.constant 1 : i32
    %22 = vector.broadcast %c1_i32 : i32 to vector<2x1xi32>
    %23 = arith.addi %7, %22 : vector<2x1xi32>
    %c8_i32_7 = arith.constant 8 : i32
    %24 = vector.broadcast %c8_i32_7 : i32 to vector<2x1xi32>
    %25 = arith.minsi %23, %24 : vector<2x1xi32>
    %26 = arith.sitofp %25 : vector<2x1xi32> to vector<2x1xf32>
    %27 = vector.shape_cast %26 : vector<2x1xf32> to vector<1x2x1xf32>
    %cst_8 = arith.constant dense<0.000000e+00> : vector<1xf32>
    %28 = vector.multi_reduction <add>, %27, %cst_8 [1, 2] : vector<1x2x1xf32> to vector<1xf32>
    %29 = vector.shape_cast %28 : vector<1xf32> to vector<1x1x1xf32>
    %30 = vector.extract %29[0, 0, 0] : f32 from vector<1x1x1xf32>
    %c0_9 = arith.constant 0 : index
    %c0_10 = arith.constant 0 : index
    %31 = memref.load %arg0[%c0_9, %c0_10] : memref<1x1xf32, #tpu.memory_space<smem>>
    %cst_11 = arith.constant 0.000000e+00 : f32
    %32 = arith.subf %cst_11, %31 : f32
    %33 = arith.mulf %32, %21 : f32
    %34 = arith.divf %33, %30 : f32
    %c0_12 = arith.constant 0 : index
    %c0_13 = arith.constant 0 : index
    %35 = memref.load %arg4[%c0_12, %c0_13] : memref<1x1xf32, #tpu.memory_space<smem>>
    memref.store %34, %arg4[%c0_12, %c0_13] : memref<1x1xf32, #tpu.memory_space<smem>>
    %36 = vector.shape_cast %16 : vector<2x1xf32> to vector<1x2x1xf32>
    %cst_14 = arith.constant dense<0.000000e+00> : vector<1xf32>
    %37 = vector.multi_reduction <add>, %36, %cst_14 [1, 2] : vector<1x2x1xf32> to vector<1xf32>
    %38 = vector.shape_cast %37 : vector<1xf32> to vector<1x1x1xf32>
    %39 = vector.extract %38[0, 0, 0] : f32 from vector<1x1x1xf32>
    %cst_15 = arith.constant 2.000000e+00 : f32
    %40 = arith.divf %39, %cst_15 : f32
    %c0_16 = arith.constant 0 : index
    %c0_17 = arith.constant 0 : index
    %41 = memref.load %arg5[%c0_16, %c0_17] : memref<1x1xf32, #tpu.memory_space<smem>>
    memref.store %40, %arg5[%c0_16, %c0_17] : memref<1x1xf32, #tpu.memory_space<smem>>
    return
  }
}

</mosaic_0001>

<llo_original>
// kernel: reward_criterion_aic_kernel.1
$region0: #{reward_criterion_aic_kernel.1}
  #allocation0 [shape = 'u32[]', space=smem, size = 0x4, offset = 0x4, fixed_abs, tag = 'smem constant byte address 0x4 - core index']
  #allocation1 [shape = 'u32[144,128]{1,0:T(1,128)}', space=vmem, size = 0x12000, scoped, tag = 'internal scratch']
  #allocation2 [shape = 'f32[1,1]{1,0:T(1,128)S(6)}', space=smem, size = 0x200, scoped, tag = 'scoped memory for reward_criterion_aic_kernel.1']
  %s0 = inlined_call_operand.<no memory space> [shape: f32[1,1], index: 0, kind: input, shape index: {}]
  %s1 = inlined_call_operand.vmem [shape: s32[2,8], index: 1, kind: input, shape index: {}]
  %s2 = inlined_call_operand.vmem [shape: f32[2,8], index: 2, kind: input, shape index: {}]
  %s3 = inlined_call_operand.vmem [shape: f32[2,1], index: 3, kind: input, shape index: {}]
  %s4 = inlined_call_operand.hbm [shape: f32[1,1], index: 4, kind: output, shape index: {0}]
  %s5 = inlined_call_operand.hbm [shape: f32[1,1], index: 5, kind: output, shape index: {1}]
  %6 = xla_tuple %s4, %s5
  %s7 = sld [smem:[#allocation0]]
  $region34: #{reward_criterion_aic_kernel.1} parent=0
    _
  %s9 = ssub.s32 1, %s7
  %s10 = scalar_select 0, %s9, %s7
  %11 = sst [smem:[#allocation2]] %s0
  $region1: #{reward_criterion_aic_kernel.1} parent=0
    #allocation3 [shape = 'u8[512]{0}', space=smem, size = 0x200, scoped, tag = 'output window, operand 0, single buffered']
    #allocation4 [shape = 's32[1]{0}', space=sflag, size = 0x4, scoped, tag = 'scoped memory for reward_criterion_aic_kernel.1']
    #allocation5 [shape = 'u8[512]{0}', space=smem, size = 0x200, scoped, tag = 'output window, operand 1, single buffered']
    #allocation6 [shape = 's32[1]{0}', space=sflag, size = 0x4, scoped, tag = 'scoped memory for reward_criterion_aic_kernel.1']
    %12 = vsyncpa [#allocation4], 0
    %13 = vsyncpa [#allocation6], 0
    // Predicated region
    $region2: #{reward_criterion_aic_kernel.1} parent=1 // pred_check
      _
    $region3: #{reward_criterion_aic_kernel.1} parent=1 // pred_check_branch
      %15 = sbr.rel (0) target = $region5
    $region4: #{reward_criterion_aic_kernel.1} parent=1 // pred_region
      _
    $region5: #{reward_criterion_aic_kernel.1} parent=1 // pred_fallthru
      _
    // Predicated region
    $region6: #{reward_criterion_aic_kernel.1} parent=1 // pred_check
      _
    $region7: #{reward_criterion_aic_kernel.1} parent=1 // pred_check_branch
      %17 = sbr.rel (0) target = $region9
    $region8: #{reward_criterion_aic_kernel.1} parent=1 // pred_region
      _
    $region9: #{reward_criterion_aic_kernel.1} parent=1 // pred_fallthru
      _
    // Predicated region
    $region10: #{reward_criterion_aic_kernel.1} parent=1 // pred_check
      _
    $region11: #{reward_criterion_aic_kernel.1} parent=1 // pred_check_branch
      %19 = sbr.rel (0) target = $region13
    $region12: #{reward_criterion_aic_kernel.1} parent=1 // pred_region
      _
    $region13: #{reward_criterion_aic_kernel.1} parent=1 // pred_fallthru
      _
    // Predicated region
    $region14: #{reward_criterion_aic_kernel.1} parent=1 // pred_check
      _
    $region15: #{reward_criterion_aic_kernel.1} parent=1 // pred_check_branch
      %21 = sbr.rel (0) target = $region17
    $region16: #{reward_criterion_aic_kernel.1} parent=1 // pred_region
      _
    $region17: #{reward_criterion_aic_kernel.1} parent=1 // pred_fallthru
      _
    %v22 = vld [vmem:[%s1] sm:$0x3]
    %v23 = vlaneseq
    %v24 = vand.u32 %v23, 127
    %vm25 = vcmp.eq.s32.totalorder %v22, 0
    %v26 = vsel %vm25, %v24, 8
    %vm27 = vcmask 58368
    %v28 = vsel %vm27, %v26, 2147483647
    %v29 = vand.u32 %v28, 65535
    %v30 = vshra.s32 %v28, 16
    %v31 = vcvt.s32.f32 %v29
    %v32 = vcvt.s32.f32 %v30
    %33 = vmin.xlane.f32.xlu0 %v32
    %v34 = vpop.xlane.xlu0 %33
    %vm35 = vcmp.eq.f32.partialorder %v32, %v34
    %v36 = vsel %vm35, %v31, inf
    %37 = vmin.xlane.f32.xlu0 %v36
    %v38 = vpop.xlane.xlu0 %37
    %v39 = vcvt.f32.s32 %v38
    %v40 = vcvt.f32.s32 %v34
    %v41 = vshll.u32 %v40, 16
    %v42 = vadd.s32 %v41, %v39
    %vm43 = vcmp.le.s32.totalorder %v24, %v42
    %v44 = vsel %vm43, 1, 0
    %v45 = vcvt.s32.f32 %v44
    %v46 = vld [vmem:[%s2] sm:$0x3]
    %v47 = vmul.f32 %v46, %v45
    %v48 = vsel %vm27, %v47, 0.0
    %49 = vadd.xlane.f32.xlu0 %v48
    %v50 = vpop.xlane.xlu0 %49
    %v51 = vld [vmem:[%s3] sm:$0x3]
    %v52 = vmul.f32 %v50, %v51
    %vm53 = vcmask 1024
    %v54 = vsel %vm53, %v52, 0.0
    %55 = vadd.xlane.f32.xlu0 %v54
    %v56 = vpop.xlane.xlu0 %55
    %v57 = vrot.slane %v56, 4
    %v58 = vadd.f32 %v56, %v57
    %v59 = vrot.slane %v58, 2
    %v60 = vadd.f32 %v58, %v59
    %v61 = vrot.slane %v60, 1
    %v62 = vadd.f32 %v60, %v61
    %s63 = vtos %v62
    %v64 = vadd.s32 %v42, 1
    %vm65 = vcmp.lt.s32.totalorder %v64, 8
    %v66 = vsel %vm65, %v64, 8
    %v67 = vcvt.s32.f32 %v66
    %v68 = vsel %vm53, %v67, 0.0
    %69 = vadd.xlane.f32.xlu0 %v68
    %v70 = vpop.xlane.xlu0 %69
    %v71 = vrot.slane %v70, 4
    %v72 = vadd.f32 %v70, %v71
    %v73 = vrot.slane %v72, 2
    %v74 = vadd.f32 %v72, %v73
    %v75 = vrot.slane %v74, 1
    %v76 = vadd.f32 %v74, %v75
    %s77 = vtos %v76
    %s78 = sld [smem:[#allocation2]]
    %s79 = ssub.f32 0.0, %s78
    %s80 = smul.f32 %s79, %s63
    %v81 = vstv %s77
    %v82 = vrcp.pop %v81
    %s83 = vtos %v82
    %s84 = smul.f32 %s80, %s83
    %s85 = scalar_lea.smem [#allocation3], 0
    %86 = sst [smem:[%s85]] %s84
    %v87 = vsel %vm53, %v51, 0.0
    %88 = vadd.xlane.f32.xlu0 %v87
    %v89 = vpop.xlane.xlu0 %88
    %v90 = vrot.slane %v89, 4
    %v91 = vadd.f32 %v89, %v90
    %v92 = vrot.slane %v91, 2
    %v93 = vadd.f32 %v91, %v92
    %v94 = vrot.slane %v93, 1
    %v95 = vadd.f32 %v93, %v94
    %s96 = vtos %v95
    %v97 = vrcp.pop 2.0
    %s98 = vtos %v97
    %s99 = smul.f32 %s96, %s98
    %s100 = scalar_lea.smem [#allocation5], 0
    %101 = sst [smem:[%s100]] %s99
    // Predicated region
    $region18: #{reward_criterion_aic_kernel.1} parent=1 // pred_check
      _
    $region19: #{reward_criterion_aic_kernel.1} parent=1 // pred_check_branch
      %103 = sbr.rel (0) target = $region21
    $region20: #{reward_criterion_aic_kernel.1} parent=1 // pred_region
      %s105 = ssub.s32 16, 16
      %106 = vsyncadd [#allocation4], %s105
      %109 = dma.smem_to_hbm [#allocation3], 16, %s4, [#allocation4]
    $region21: #{reward_criterion_aic_kernel.1} parent=1 // pred_fallthru
      _
    // Predicated region
    $region22: #{reward_criterion_aic_kernel.1} parent=1 // pred_check
      _
    $region23: #{reward_criterion_aic_kernel.1} parent=1 // pred_check_branch
      %111 = sbr.rel (0) target = $region25
    $region24: #{reward_criterion_aic_kernel.1} parent=1 // pred_region
      %s113 = ssub.s32 16, 16
      %114 = vsyncadd [#allocation6], %s113
      %117 = dma.smem_to_hbm [#allocation5], 16, %s5, [#allocation6]
    $region25: #{reward_criterion_aic_kernel.1} parent=1 // pred_fallthru
      _
    // Predicated region
    $region26: #{reward_criterion_aic_kernel.1} parent=1 // pred_check
      _
    $region27: #{reward_criterion_aic_kernel.1} parent=1 // pred_check_branch
      %119 = sbr.rel (0) target = $region29
    $region28: #{reward_criterion_aic_kernel.1} parent=1 // pred_region
      %120 = dma.done [#allocation4], 16
    $region29: #{reward_criterion_aic_kernel.1} parent=1 // pred_fallthru
      _
    // Predicated region
    $region30: #{reward_criterion_aic_kernel.1} parent=1 // pred_check
      _
    $region31: #{reward_criterion_aic_kernel.1} parent=1 // pred_check_branch
      %122 = sbr.rel (0) target = $region33
    $region32: #{reward_criterion_aic_kernel.1} parent=1 // pred_region
      %123 = dma.done [#allocation6], 16
    $region33: #{reward_criterion_aic_kernel.1} parent=1 // pred_fallthru
      _
    %124 = sfence
    %125 = vsyncpa [#allocation4], 1
    %126 = vsyncpa [#allocation6], 1

</llo_original>
